<compile_context>
chip_gen: v7x
topology: tpu7x:2x2x1
jax: 0.10.0
libtpu: 0.0.40
codegen_flags: <defaults>
</compile_context>

<pallas_src>
import jax
import jax.numpy as jnp
from jax.experimental import pallas as pl
from jax.experimental.pallas import tpu as pltpu


def _combine_kernel(w_ref, *refs):
    """Unrolled weighted sum.

    w_ref: (S,) float32 in SMEM (scalar reads).
    refs : (x_0, ..., x_{S-1}, o_ref), each (1, tile) float32 in VMEM.
    """
    xs, o_ref = refs[:-1], refs[-1]
    acc = xs[0][...] * w_ref[0]
    for i in range(1, len(xs)):
        acc = acc + xs[i][...] * w_ref[i]
    o_ref[...] = acc


# 16384 f32 lanes = 64 KiB per block; with S inputs + output double-buffered the
# VMEM footprint stays well below the v5e 16 MiB scoped limit (and v7x 32 MiB).
_LANE_TILE = 16384


def weight_combiner_for_dict(weight_coeff, **sub_outputs):
    """JAX/Pallas equivalent of WeightCombiner_for_dict.forward.

    weight_coeff: (S,) float32 parameter.
    sub_outputs:  S keyword tensors, each (B, 4).
    Returns: (B, 4) float32.
    """
    S = int(weight_coeff.shape[0])
    vals = tuple(sub_outputs.values())
    assert len(vals) == S
    B, C = vals[0].shape
    assert C == 4
    for v in vals:
        assert v.shape == (B, C)

    N = B * C
    # Lane-dense relayout: (B, 4) -> (1, B*4). Row-major contiguous reshape,
    # so no data movement; no stacked (B, S, 4) tensor is ever materialized.
    flat = tuple(v.astype(jnp.float32).reshape(1, N) for v in vals)
    w = weight_coeff.astype(jnp.float32)

    # Tile the lane axis only when it is large and 128-aligned; otherwise use a
    # single full-extent block (satisfies the (8,128) block constraint).
    if N > _LANE_TILE and N % _LANE_TILE == 0:
        tile = _LANE_TILE
    else:
        tile = N
    grid = (N // tile,)

    data_spec = pl.BlockSpec((1, tile), lambda i: (0, i))

    out_flat = pl.pallas_call(
        _combine_kernel,
        out_shape=jax.ShapeDtypeStruct((1, N), jnp.float32),
        grid=grid,
        in_specs=[pl.BlockSpec(memory_space=pltpu.MemorySpace.SMEM)]  # weights
        + [data_spec] * S,                                            # S inputs
        out_specs=data_spec,
        compiler_params=pltpu.CompilerParams(
            dimension_semantics=("parallel",)),
    )(w, *flat)
    return out_flat.reshape(B, C)


def multi_cnn_exp453_forward(parallel_sub_cnns, weight_coeff, Xs):
    """MultiCNN_exp453.forward: sub_outputs = parallel_sub_cnns(Xs);
    return weight_combiner(**sub_outputs)."""
    # TODO(synk): the parallel sub-CNN architectures are not defined in the spec;
    # they are treated as an opaque JAX callable and only the combiner is a Pallas kernel.
    sub_outputs = parallel_sub_cnns(Xs)
    return weight_combiner_for_dict(weight_coeff, **sub_outputs)


if __name__ == "__main__":
    S, B, C = 3, 2, 4
    key = jax.random.PRNGKey(0)
    keys = jax.random.split(key, S + 1)

    # Stand-in "parallel_sub_cnns": S deterministic (B, 4) sub-outputs.
    sub_outputs = {
        f"sub_cnn_{i}": jax.random.normal(keys[i], (B, C), dtype=jnp.float32)
        for i in range(S)
    }
    # Parameter init as in the original module: ones(S) / S
    weight_coeff = jnp.ones((S,), dtype=jnp.float32) / S

    out = multi_cnn_exp453_forward(lambda _: sub_outputs, weight_coeff, None)
    jax.block_until_ready(out)

    stacked_ref = jnp.stack(tuple(sub_outputs.values()), axis=1)
    ref = jnp.sum(stacked_ref * weight_coeff.reshape(1, S, 1), axis=1)
    assert out.shape == (B, C)
    assert jnp.allclose(out, ref, atol=1e-6, rtol=1e-6)

    # Exercise the tiled (gridded, double-buffered) lane path with a larger batch.
    B2 = 8192  # N = 32768 -> two 16384-lane tiles
    keys2 = jax.random.split(keys[S], S + 1)
    sub_outputs2 = {
        f"sub_cnn_{i}": jax.random.normal(keys2[i], (B2, C), dtype=jnp.float32)
        for i in range(S)
    }
    w2 = jax.random.normal(keys2[S], (S,), dtype=jnp.float32)
    out2 = weight_combiner_for_dict(w2, **sub_outputs2)
    jax.block_until_ready(out2)
    ref2 = jnp.sum(
        jnp.stack(tuple(sub_outputs2.values()), axis=1) * w2.reshape(1, S, 1),
        axis=1,
    )
    assert out2.shape == (B2, C)
    assert jnp.allclose(out2, ref2, atol=1e-5, rtol=1e-5)

    print("KERNEL_OK")
</pallas_src>

<mosaic_0001>
module attributes {stable_mosaic.version = 11 : i64} {
  func.func @_combine_kernel(%arg0: i32, %arg1: memref<3xf32, #tpu.memory_space<smem>>, %arg2: memref<1x8xf32, #tpu.memory_space<vmem>>, %arg3: memref<1x8xf32, #tpu.memory_space<vmem>>, %arg4: memref<1x8xf32, #tpu.memory_space<vmem>>, %arg5: memref<1x8xf32, #tpu.memory_space<vmem>>) attributes {dimension_semantics = [#tpu.dimension_semantics<parallel>], iteration_bounds = array<i64: 1>, scalar_prefetch = 0 : i64, scratch_operands = 0 : i64, tpu.core_type = #tpu.core_type<tc>, window_params = [{transform_indices = @transform_0, window_bounds = array<i64: 3>}, {transform_indices = @transform_1, window_bounds = array<i64: 1, 8>}, {transform_indices = @transform_2, window_bounds = array<i64: 1, 8>}, {transform_indices = @transform_3, window_bounds = array<i64: 1, 8>}, {transform_indices = @transform_4, window_bounds = array<i64: 1, 8>}]} {
    %c0 = arith.constant 0 : index
    %c0_0 = arith.constant 0 : index
    %0 = vector.load %arg2[%c0, %c0_0] : memref<1x8xf32, #tpu.memory_space<vmem>>, vector<1x8xf32>
    %c0_1 = arith.constant 0 : index
    %1 = memref.load %arg1[%c0_1] : memref<3xf32, #tpu.memory_space<smem>>
    %2 = vector.broadcast %1 : f32 to vector<1x8xf32>
    %3 = arith.mulf %0, %2 : vector<1x8xf32>
    %c0_2 = arith.constant 0 : index
    %c0_3 = arith.constant 0 : index
    %4 = vector.load %arg3[%c0_2, %c0_3] : memref<1x8xf32, #tpu.memory_space<vmem>>, vector<1x8xf32>
    %c1 = arith.constant 1 : index
    %5 = memref.load %arg1[%c1] : memref<3xf32, #tpu.memory_space<smem>>
    %6 = vector.broadcast %5 : f32 to vector<1x8xf32>
    %7 = arith.mulf %4, %6 : vector<1x8xf32>
    %8 = arith.addf %3, %7 : vector<1x8xf32>
    %c0_4 = arith.constant 0 : index
    %c0_5 = arith.constant 0 : index
    %9 = vector.load %arg4[%c0_4, %c0_5] : memref<1x8xf32, #tpu.memory_space<vmem>>, vector<1x8xf32>
    %c2 = arith.constant 2 : index
    %10 = memref.load %arg1[%c2] : memref<3xf32, #tpu.memory_space<smem>>
    %11 = vector.broadcast %10 : f32 to vector<1x8xf32>
    %12 = arith.mulf %9, %11 : vector<1x8xf32>
    %13 = arith.addf %8, %12 : vector<1x8xf32>
    %c0_6 = arith.constant 0 : index
    %c0_7 = arith.constant 0 : index
    %14 = vector.load %arg5[%c0_6, %c0_7] : memref<1x8xf32, #tpu.memory_space<vmem>>, vector<1x8xf32>
    tpu.vector_store %arg5[%c0_6, %c0_7], %13 {strides = array<i32>} : memref<1x8xf32, #tpu.memory_space<vmem>>, vector<1x8xf32>,
    return
  }
  func.func @transform_0(%arg0: i32) -> i32 {
    %c0_i32 = arith.constant 0 : i32
    %c0_i32_0 = arith.constant 0 : i32
    return %c0_i32 : i32
  }
  func.func @transform_1(%arg0: i32) -> (i32, i32) {
    %c0_i32 = arith.constant 0 : i32
    %c0_i32_0 = arith.constant 0 : i32
    return %c0_i32, %arg0 : i32, i32
  }
  func.func @transform_2(%arg0: i32) -> (i32, i32) {
    %c0_i32 = arith.constant 0 : i32
    %c0_i32_0 = arith.constant 0 : i32
    return %c0_i32, %arg0 : i32, i32
  }
  func.func @transform_3(%arg0: i32) -> (i32, i32) {
    %c0_i32 = arith.constant 0 : i32
    %c0_i32_0 = arith.constant 0 : i32
    return %c0_i32, %arg0 : i32, i32
  }
  func.func @transform_4(%arg0: i32) -> (i32, i32) {
    %c0_i32 = arith.constant 0 : i32
    %c0_i32_0 = arith.constant 0 : i32
    return %c0_i32, %arg0 : i32, i32
  }
}

</mosaic_0001>

<llo_original>
// kernel: tpu_custom_call.1
$region0: #{tpu_custom_call.1}
  #allocation0 [shape = 'u32[]', space=smem, size = 0x4, offset = 0x4, fixed_abs, tag = 'smem constant byte address 0x4 - core index']
  #allocation1 [shape = 'u32[144,128]{1,0:T(1,128)}', space=vmem, size = 0x12000, scoped, tag = 'internal scratch']
  %s0 = inlined_call_operand.hbm [shape: f32[3], index: 0, kind: input, shape index: {}]
  %s1 = inlined_call_operand.vmem [shape: f32[1,8], index: 1, kind: input, shape index: {}]
  %s2 = inlined_call_operand.vmem [shape: f32[1,8], index: 2, kind: input, shape index: {}]
  %s3 = inlined_call_operand.vmem [shape: f32[1,8], index: 3, kind: input, shape index: {}]
  %s4 = inlined_call_operand.hbm [shape: f32[1,8], index: 4, kind: output, shape index: {}]
  %s5 = sld [smem:[#allocation0]]
  $region30: #{tpu_custom_call.1} parent=0
    _
  %s7 = ssub.s32 1, %s5
  %s8 = scalar_select 0, %s7, %s5
  $region1: #{tpu_custom_call.1} parent=0
    #allocation2 [shape = 'u8[512]{0}', space=smem, size = 0x200, scoped, tag = 'input window, operand 0, single buffered']
    #allocation3 [shape = 's32[1]{0}', space=sflag, size = 0x4, scoped, tag = 'scoped memory for tpu_custom_call.1']
    #allocation4 [shape = 's32[1]{0}', space=sflag, size = 0x4, scoped, tag = 'scoped memory for tpu_custom_call.1']
    #allocation5 [shape = 'u8[512]{0}', space=vmem, size = 0x400, scoped, tag = 'output window, operand 0, single buffered']
    %9 = vsyncpa [#allocation4], 0
    %10 = vsyncpa [#allocation3], 0
    // Predicated region
    $region2: #{tpu_custom_call.1} parent=1 // pred_check
      _
    $region3: #{tpu_custom_call.1} parent=1 // pred_check_branch
      %12 = sbr.rel (0) target = $region5
    $region4: #{tpu_custom_call.1} parent=1 // pred_region
      %s14 = ssub.s32 16, 16
      %15 = vsyncadd [#allocation4], %s14
      %18 = dma.hbm_to_smem %s0, 16, [#allocation2], [#allocation4]
    $region5: #{tpu_custom_call.1} parent=1 // pred_fallthru
      _
    // Predicated region
    $region6: #{tpu_custom_call.1} parent=1 // pred_check
      _
    $region7: #{tpu_custom_call.1} parent=1 // pred_check_branch
      %20 = sbr.rel (0) target = $region9
    $region8: #{tpu_custom_call.1} parent=1 // pred_region
      _
    $region9: #{tpu_custom_call.1} parent=1 // pred_fallthru
      _
    // Predicated region
    $region10: #{tpu_custom_call.1} parent=1 // pred_check
      _
    $region11: #{tpu_custom_call.1} parent=1 // pred_check_branch
      %22 = sbr.rel (0) target = $region13
    $region12: #{tpu_custom_call.1} parent=1 // pred_region
      _
    $region13: #{tpu_custom_call.1} parent=1 // pred_fallthru
      _
    // Predicated region
    $region14: #{tpu_custom_call.1} parent=1 // pred_check
      _
    $region15: #{tpu_custom_call.1} parent=1 // pred_check_branch
      %24 = sbr.rel (0) target = $region17
    $region16: #{tpu_custom_call.1} parent=1 // pred_region
      _
    $region17: #{tpu_custom_call.1} parent=1 // pred_fallthru
      _
    // Predicated region
    $region18: #{tpu_custom_call.1} parent=1 // pred_check
      _
    $region19: #{tpu_custom_call.1} parent=1 // pred_check_branch
      %26 = sbr.rel (0) target = $region21
    $region20: #{tpu_custom_call.1} parent=1 // pred_region
      %27 = dma.done [#allocation4], 16
    $region21: #{tpu_custom_call.1} parent=1 // pred_fallthru
      _
    %28 = sfence
    %v29 = vld [vmem:[%s1] sm:$0x1]
    %s30 = sld [smem:[#allocation2]]
    %v31 = vstv %s30
    %v32 = vmul.f32 %v29, %v31
    %v33 = vld [vmem:[%s2] sm:$0x1]
    %s34 = sld [smem:[#allocation2 + $0x1]]
    %v35 = vstv %s34
    %v36 = vmul.f32 %v33, %v35
    %v37 = vadd.f32 %v32, %v36
    %v38 = vld [vmem:[%s3] sm:$0x1]
    %s39 = sld [smem:[#allocation2 + $0x2]]
    %v40 = vstv %s39
    %v41 = vmul.f32 %v38, %v40
    %v42 = vadd.f32 %v37, %v41
    %vm43 = vcmask 57344
    %44 = vst.msk [vmem:[#allocation5] sm:$0x1] %vm43, %v42
    // Predicated region
    $region22: #{tpu_custom_call.1} parent=1 // pred_check
      _
    $region23: #{tpu_custom_call.1} parent=1 // pred_check_branch
      %46 = sbr.rel (0) target = $region25
    $region24: #{tpu_custom_call.1} parent=1 // pred_region
      %s48 = ssub.s32 16, 16
      %49 = vsyncadd [#allocation3], %s48
      %s51 = sshll.u32 [#allocation5], 4
      %s52 = int_to_ptr.vmem [resolvable:$true] %s51
      %54 = dma.vmem_to_hbm [thread:$0]  %s52, 16, %s4, [#allocation3]
    $region25: #{tpu_custom_call.1} parent=1 // pred_fallthru
      _
    // Predicated region
    $region26: #{tpu_custom_call.1} parent=1 // pred_check
      _
    $region27: #{tpu_custom_call.1} parent=1 // pred_check_branch
      %56 = sbr.rel (0) target = $region29
    $region28: #{tpu_custom_call.1} parent=1 // pred_region
      %57 = dma.done [#allocation3], 16
    $region29: #{tpu_custom_call.1} parent=1 // pred_fallthru
      _
    %58 = vsyncpa [#allocation3], 1
    %59 = vsyncpa [#allocation4], 1

</llo_original>
